<compile_context>
chip_gen: v7x
topology: tpu7x:2x2x1
jax: 0.10.0
libtpu: 0.0.40
codegen_flags: <defaults>
</compile_context>

<pallas_src>
import functools

import jax
import jax.numpy as jnp
from jax.experimental import pallas as pl
from jax.experimental.pallas import tpu as pltpu


def _round_up(a: int, m: int) -> int:
    return ((a + m - 1) // m) * m


def _vmem_physical_bytes() -> int:
    """Physical VMEM of the current TPU generation (fallback: v7x's 64 MiB/TC)."""
    try:
        info = pltpu.get_tpu_info()
        cap = int(getattr(info, "vmem_capacity_bytes", 0) or 0)
        if cap > 0:
            return max(cap, 32 << 20)
    except Exception:
        pass
    return 64 << 20


def _apply_power(v, power: float):
    """v ** power, avoiding exp+log on the single EUP slot where possible."""
    if power == 1.0:
        return v
    ip = int(power)
    frac = power - ip
    if frac == 0.0 and 1 <= ip <= 8:
        out = v
        for _ in range(ip - 1):
            out = out * v
        return out
    if frac == 0.5 and 0 <= ip <= 8:
        out = jnp.sqrt(v)
        for _ in range(ip):
            out = out * v
        return out
    return v ** power


# ---------------------------------------------------------------------------
# Pallas kernel (one batch tile per grid step)
# ---------------------------------------------------------------------------
def _assignment_kernel(w_ref, x_ref, ct_ref, csq_ref, out_ref, *, power):
    """w_ref:   VMEM f32[TB, 1]       per-sample weights, pre-divided by alpha
       x_ref:   VMEM    [TB, D]       batch embeddings tile (native dtype)
       ct_ref:  VMEM bf16[D, K_PAD]   cluster centers^T, pre-scaled by -2 (resident)
       csq_ref: VMEM f32[1, K_PAD]    per-cluster ||c||^2 (resident)
       out_ref: VMEM f32[TB, K_PAD]   soft assignment tile
       power:   compile-time Python float.
    """
    x = x_ref[...]                      # (TB, D)
    w = w_ref[...]                      # (TB, 1)
    ct = ct_ref[...]                    # (D, K_PAD) bf16, = -2 * c^T
    csq = csq_ref[...]                  # (1, K_PAD)

    # ||x_b||^2 per row in f32 (exact even if the HBM batch is bf16).
    xf = x.astype(jnp.float32)
    xsq = jnp.sum(xf * xf, axis=1, keepdims=True)                  # (TB, 1)

    # MXU: bf16 operands, f32 accumulate.  ct pre-scaled by -2 in the wrapper,
    # so this is already -2 * x . c.
    xc = jnp.dot(x.astype(jnp.bfloat16), ct,
                 preferred_element_type=jnp.float32)               # (TB, K_PAD)

    # Squared distance; clamp the tiny negatives the expansion can produce
    # via cancellation (worse with bf16 matmul operands).
    dist = jnp.maximum(xsq + xc + csq, 0.0)                        # (TB, K_PAD)

    # Student's t numerator: (1 / (1 + w*dist/alpha)) ** power, with 1/alpha
    # folded into w.  Reciprocal rides the otherwise-idle EUP slot.
    numerator = pl.reciprocal(1.0 + w * dist, approx=True)
    numerator = _apply_power(numerator, power)

    # Faithful to the reference: assignment = numerator / numerator.
    # TODO(synk): reference almost certainly intended numerator / denumerator
    # (row-normalised soft assignment); reproducing the code as written.  If
    # normalisation is restored, the padded K lanes must be masked before the
    # row sum and the reciprocal made exact.
    out_ref[...] = numerator / numerator

    # TODO(synk): the PyTorch module raises ValueError on NaNs (data-dependent
    # host-side control flow); not representable inside the kernel.


# ---------------------------------------------------------------------------
# Python glue: sample weights (matches WeightedClusterAssignment.weights)
# ---------------------------------------------------------------------------
def compute_weights(labels, idx, cluster_predicted, cluster_positive_ratio,
                    positive_ratio_threshold):
    order = jnp.argsort(cluster_predicted[:, 0])
    predictions = cluster_predicted[:, 1][order][idx]
    ratios = cluster_positive_ratio[predictions.astype(jnp.int32)]
    positive_clusters = ratios > positive_ratio_threshold
    w = 0.5 * (labels == 0).astype(jnp.float32) + (labels == 1).astype(jnp.float32)
    w = w * positive_clusters.astype(jnp.float32)
    w = w + (~positive_clusters).astype(jnp.float32)
    return w                                                # (B,)


# ---------------------------------------------------------------------------
# Wrapper calling the Pallas kernel
# ---------------------------------------------------------------------------
def weighted_cluster_assignment(batch, labels, idx, cluster_centers,
                                cluster_predicted, cluster_positive_ratio,
                                positive_ratio_threshold, alpha):
    B, D = batch.shape
    K, _ = cluster_centers.shape

    alpha = float(alpha)
    power = (alpha + 1.0) / 2.0

    # Per-sample weights with 1/alpha folded in (kernel epilogue then needs no
    # *2, +alpha, *alpha passes over the (TB, K_PAD) tile).
    w = (compute_weights(labels, idx, cluster_predicted, cluster_positive_ratio,
                         positive_ratio_threshold) / alpha)
    w = w.astype(jnp.float32).reshape(B, 1)

    # Resident cluster-center operands: K padded to 128 lanes (lane-dense,
    # unmasked output stores), centers transposed AND pre-scaled by -2, bf16.
    K_PAD = _round_up(K, 128)
    c = jnp.pad(cluster_centers.astype(jnp.float32), ((0, K_PAD - K), (0, 0)))
    ct = (-2.0 * c).T.astype(jnp.bfloat16)                  # (D, K_PAD)
    csq = jnp.sum(c * c, axis=1).reshape(1, K_PAD)          # (1, K_PAD), f32

    # Batch stays in HBM as-is (no pad copy, no astype copy); bf16 cast for the
    # MXU happens inside the kernel.
    x = batch

    # --- generation-aware tiling / VMEM budget -------------------------------
    phys = _vmem_physical_bytes()                 # 64 MiB/TC v7x, 128 MiB v5e/v6e
    headroom = max(8 << 20, phys // 8)            # compiler-internal scratch
    vmem_cap = phys - headroom
    tile_budget = int(vmem_cap * 0.6)

    x_bytes = jnp.dtype(x.dtype).itemsize
    resident_bytes = ct.size * 2 + csq.size * 4                  # single-buffered
    per_row = 2 * (x_bytes * D + 4 + 4 * K_PAD)                  # double-buffered

    if B < 8:
        TILE_B = B                                # full-dim block, always legal
    else:
        cap_rows = max(8, ((tile_budget - resident_bytes) // per_row) // 8 * 8)
        TILE_B = max(8, min(1024, cap_rows, (B // 8) * 8))
        # v7x megacore: prefer >= 2 batch tiles so both TensorCores get work.
        if B >= 16 and pl.cdiv(B, TILE_B) < 2:
            TILE_B = min(TILE_B, _round_up(pl.cdiv(B, 2), 8))
    grid = (pl.cdiv(B, TILE_B),)

    needed = resident_bytes + per_row * TILE_B
    vmem_limit = int(min(max(4 * needed, 16 << 20), vmem_cap))

    # NOTE: if D*K_PAD ever grows large enough to pressure VMEM, add a second
    # "parallel" grid axis over K (ct block (D, TILE_K), TILE_K % 128 == 0).

    kernel = functools.partial(_assignment_kernel, power=power)

    def _run(single_buffer_resident: bool):
        res_kw = ({"pipeline_mode": pl.Buffered(1)}
                  if single_buffer_resident else {})
        in_specs = [
            pl.BlockSpec((TILE_B, 1), lambda i: (i, 0)),            # w / alpha
            pl.BlockSpec((TILE_B, D), lambda i: (i, 0)),            # batch tile
            pl.BlockSpec((D, K_PAD), lambda i: (0, 0), **res_kw),   # -2*c^T (resident)
            pl.BlockSpec((1, K_PAD), lambda i: (0, 0), **res_kw),   # ||c||^2 (resident)
        ]
        return pl.pallas_call(
            kernel,
            out_shape=jax.ShapeDtypeStruct((B, K_PAD), jnp.float32),
            grid_spec=pltpu.PrefetchScalarGridSpec(
                num_scalar_prefetch=0,
                grid=grid,
                in_specs=in_specs,
                out_specs=pl.BlockSpec((TILE_B, K_PAD), lambda i: (i, 0)),
            ),
            compiler_params=pltpu.CompilerParams(
                dimension_semantics=("parallel",),
                vmem_limit_bytes=vmem_limit,
            ),
        )(w, x, ct, csq)

    try:
        out = _run(True)
    except Exception:
        # Fallback for JAX versions without BlockSpec(pipeline_mode=Buffered).
        out = _run(False)

    # Consumers that tolerate K_PAD lanes can take `out` directly and skip
    # this slice (saves one (B, K) read+write in XLA).
    return out[:, :K]


# ---------------------------------------------------------------------------
# Pure-JAX reference (mirrors the PyTorch forward) for validation
# ---------------------------------------------------------------------------
def reference_forward(batch, weights, cluster_centers, alpha):
    ns = jnp.sum((batch[:, None, :] - cluster_centers[None, :, :]) ** 2
                 * weights[:, None, None], axis=2)
    power = (float(alpha) + 1.0) / 2.0
    numerator = (1.0 / (1.0 + ns / alpha)) ** power
    return numerator / numerator


if __name__ == "__main__":
    B, D, K = 8, 32, 16

    key = jax.random.PRNGKey(0)
    k_batch, k_centers, k_labels, k_idx, k_pred, k_ratio = jax.random.split(key, 6)

    # Module parameters (deterministic, in-script).
    positive_ratio_threshold = 0.6
    alpha = 1.0
    # Xavier-uniform init for cluster centers: U(-b, b), b = sqrt(6/(K+D)).
    bound = (6.0 / (K + D)) ** 0.5
    cluster_centers = jax.random.uniform(k_centers, (K, D), jnp.float32,
                                         minval=-bound, maxval=bound)

    # State normally set after an E-step: cluster_predicted [N, 2] and
    # cluster_positive_ratio [K].
    N = B
    sample_ids = jax.random.permutation(k_pred, N).astype(jnp.float32)
    predicted_cluster = jax.random.randint(k_pred, (N,), 0, K).astype(jnp.float32)
    cluster_predicted = jnp.stack([sample_ids, predicted_cluster], axis=1)  # (N, 2)
    cluster_positive_ratio = jax.random.uniform(k_ratio, (K,), jnp.float32)

    # Forward inputs.
    batch = jax.random.normal(k_batch, (B, D), jnp.float32)
    labels = jax.random.randint(k_labels, (B,), 0, 2).astype(jnp.float32)
    idx = jax.random.randint(k_idx, (B,), 0, N)

    out = weighted_cluster_assignment(batch, labels, idx, cluster_centers,
                                      cluster_predicted, cluster_positive_ratio,
                                      positive_ratio_threshold, alpha)
    out = jax.block_until_ready(out)

    wts = compute_weights(labels, idx, cluster_predicted, cluster_positive_ratio,
                          positive_ratio_threshold)
    ref = reference_forward(batch, wts, cluster_centers, alpha)

    assert out.shape == (B, K), out.shape
    assert jnp.allclose(out, ref, atol=1e-6), (out, ref)
    print("KERNEL_OK")
</pallas_src>

<mosaic_0001>
module attributes {stable_mosaic.version = 11 : i64} {
  func.func @_assignment_kernel(%arg0: i32, %arg1: memref<8x1xf32, #tpu.memory_space<vmem>>, %arg2: memref<8x32xf32, #tpu.memory_space<vmem>>, %arg3: memref<32x128xbf16, #tpu.memory_space<vmem>>, %arg4: memref<1x128xf32, #tpu.memory_space<vmem>>, %arg5: memref<8x128xf32, #tpu.memory_space<vmem>>) attributes {dimension_semantics = [#tpu.dimension_semantics<parallel>], iteration_bounds = array<i64: 1>, scalar_prefetch = 0 : i64, scratch_operands = 0 : i64, tpu.core_type = #tpu.core_type<tc>, window_params = [{transform_indices = @transform_0, window_bounds = array<i64: 8, 1>}, {transform_indices = @transform_1, window_bounds = array<i64: 8, 32>}, {pipeline_mode = #tpu.pipeline_mode<synchronous>, transform_indices = @transform_2, window_bounds = array<i64: 32, 128>}, {pipeline_mode = #tpu.pipeline_mode<synchronous>, transform_indices = @transform_3, window_bounds = array<i64: 1, 128>}, {transform_indices = @transform_4, window_bounds = array<i64: 8, 128>}]} {
    %c0 = arith.constant 0 : index
    %c0_0 = arith.constant 0 : index
    %0 = vector.load %arg2[%c0, %c0_0] : memref<8x32xf32, #tpu.memory_space<vmem>>, vector<8x32xf32>
    %c0_1 = arith.constant 0 : index
    %c0_2 = arith.constant 0 : index
    %1 = vector.load %arg1[%c0_1, %c0_2] : memref<8x1xf32, #tpu.memory_space<vmem>>, vector<8x1xf32>
    %c0_3 = arith.constant 0 : index
    %c0_4 = arith.constant 0 : index
    %2 = vector.load %arg3[%c0_3, %c0_4] : memref<32x128xbf16, #tpu.memory_space<vmem>>, vector<32x128xbf16>
    %c0_5 = arith.constant 0 : index
    %c0_6 = arith.constant 0 : index
    %3 = vector.load %arg4[%c0_5, %c0_6] : memref<1x128xf32, #tpu.memory_space<vmem>>, vector<1x128xf32>
    %4 = arith.mulf %0, %0 : vector<8x32xf32>
    %cst = arith.constant dense<0.000000e+00> : vector<8xf32>
    %5 = vector.multi_reduction <add>, %4, %cst [1] : vector<8x32xf32> to vector<8xf32>
    %6 = vector.shape_cast %5 : vector<8xf32> to vector<8x1xf32>
    %7 = arith.truncf %0 : vector<8x32xf32> to vector<8x32xbf16>
    %cst_7 = arith.constant dense<0.000000e+00> : vector<8x128xf32>
    %8 = tpu.matmul %7, %2, %cst_7 {dimension_numbers = #tpu.dot_dimension_numbers<[1], [0], [0], [1], [0, 0, 1, 1], [], []>} : vector<8x32xbf16>, vector<32x128xbf16>, vector<8x128xf32> -> vector<8x128xf32>
    %9 = vector.broadcast %6 : vector<8x1xf32> to vector<8x128xf32>
    %10 = arith.addf %9, %8 : vector<8x128xf32>
    %11 = vector.broadcast %3 : vector<1x128xf32> to vector<8x128xf32>
    %12 = arith.addf %10, %11 : vector<8x128xf32>
    %cst_8 = arith.constant 0.000000e+00 : f32
    %13 = vector.broadcast %cst_8 : f32 to vector<8x128xf32>
    %14 = arith.maximumf %12, %13 : vector<8x128xf32>
    %15 = vector.broadcast %1 : vector<8x1xf32> to vector<8x128xf32>
    %16 = arith.mulf %15, %14 : vector<8x128xf32>
    %cst_9 = arith.constant 1.000000e+00 : f32
    %17 = vector.broadcast %cst_9 : f32 to vector<8x128xf32>
    %18 = arith.addf %17, %16 : vector<8x128xf32>
    %19 = tpu.reciprocal %18 {approx = true} : vector<8x128xf32> -> vector<8x128xf32>
    %20 = arith.divf %19, %19 : vector<8x128xf32>
    %c0_10 = arith.constant 0 : index
    %c0_11 = arith.constant 0 : index
    %21 = vector.load %arg5[%c0_10, %c0_11] : memref<8x128xf32, #tpu.memory_space<vmem>>, vector<8x128xf32>
    tpu.vector_store %arg5[%c0_10, %c0_11], %20 {strides = array<i32>} : memref<8x128xf32, #tpu.memory_space<vmem>>, vector<8x128xf32>,
    return
  }
  func.func @transform_0(%arg0: i32) -> (i32, i32) {
    %c0_i32 = arith.constant 0 : i32
    %c0_i32_0 = arith.constant 0 : i32
    return %arg0, %c0_i32 : i32, i32
  }
  func.func @transform_1(%arg0: i32) -> (i32, i32) {
    %c0_i32 = arith.constant 0 : i32
    %c0_i32_0 = arith.constant 0 : i32
    return %arg0, %c0_i32 : i32, i32
  }
  func.func @transform_2(%arg0: i32) -> (i32, i32) {
    %c0_i32 = arith.constant 0 : i32
    %c0_i32_0 = arith.constant 0 : i32
    %c0_i32_1 = arith.constant 0 : i32
    return %c0_i32, %c0_i32_0 : i32, i32
  }
  func.func @transform_3(%arg0: i32) -> (i32, i32) {
    %c0_i32 = arith.constant 0 : i32
    %c0_i32_0 = arith.constant 0 : i32
    %c0_i32_1 = arith.constant 0 : i32
    return %c0_i32, %c0_i32_0 : i32, i32
  }
  func.func @transform_4(%arg0: i32) -> (i32, i32) {
    %c0_i32 = arith.constant 0 : i32
    %c0_i32_0 = arith.constant 0 : i32
    return %arg0, %c0_i32 : i32, i32
  }
}

module attributes {stable_mosaic.version = 11 : i64} {
  func.func @_assignment_kernel(%arg0: i32, %arg1: memref<8x1xf32, #tpu.memory_space<vmem>>, %arg2: memref<8x32xf32, #tpu.memory_space<vmem>>, %arg3: memref<32x128xbf16, #tpu.memory_space<vmem>>, %arg4: memref<1x128xf32, #tpu.memory_space<vmem>>, %arg5: memref<8x128xf32, #tpu.memory_space<vmem>>) attributes {dimension_semantics = [#tpu.dimension_semantics<parallel>], iteration_bounds = array<i64: 1>, scalar_prefetch = 0 : i64, scratch_operands = 0 : i64, tpu.core_type = #tpu.core_type<tc>, window_params = [{transform_indices = @transform_0, window_bounds = array<i64: 8, 1>}, {transform_indices = @transform_1, window_bounds = array<i64: 8, 32>}, {pipeline_mode = #tpu.pipeline_mode<synchronous>, transform_indices = @transform_2, window_bounds = array<i64: 32, 128>}, {pipeline_mode = #tpu.pipeline_mode<synchronous>, transform_indices = @transform_3, window_bounds = array<i64: 1, 128>}, {transform_indices = @transform_4, window_bounds = array<i64: 8, 128>}]} {
    %c0 = arith.constant 0 : index
    %c0_0 = arith.constant 0 : index
    %0 = vector.load %arg2[%c0, %c0_0] : memref<8x32xf32, #tpu.memory_space<vmem>>, vector<8x32xf32>
    %c0_1 = arith.constant 0 : index
    %c0_2 = arith.constant 0 : index
    %1 = vector.load %arg1[%c0_1, %c0_2] : memref<8x1xf32, #tpu.memory_space<vmem>>, vector<8x1xf32>
    %c0_3 = arith.constant 0 : index
    %c0_4 = arith.constant 0 : index
    %2 = vector.load %arg3[%c0_3, %c0_4] : memref<32x128xbf16, #tpu.memory_space<vmem>>, vector<32x128xbf16>
    %c0_5 = arith.constant 0 : index
    %c0_6 = arith.constant 0 : index
    %3 = vector.load %arg4[%c0_5, %c0_6] : memref<1x128xf32, #tpu.memory_space<vmem>>, vector<1x128xf32>
    %4 = arith.mulf %0, %0 : vector<8x32xf32>
    %cst = arith.constant dense<0.000000e+00> : vector<8xf32>
    %5 = vector.multi_reduction <add>, %4, %cst [1] : vector<8x32xf32> to vector<8xf32>
    %6 = vector.shape_cast %5 : vector<8xf32> to vector<8x1xf32>
    %7 = arith.truncf %0 : vector<8x32xf32> to vector<8x32xbf16>
    %cst_7 = arith.constant dense<0.000000e+00> : vector<8x128xf32>
    %8 = tpu.matmul %7, %2, %cst_7 {dimension_numbers = #tpu.dot_dimension_numbers<[1], [0], [0], [1], [0, 0, 1, 1], [], []>} : vector<8x32xbf16>, vector<32x128xbf16>, vector<8x128xf32> -> vector<8x128xf32>
    %9 = vector.broadcast %6 : vector<8x1xf32> to vector<8x128xf32>
    %10 = arith.addf %9, %8 : vector<8x128xf32>
    %11 = vector.broadcast %3 : vector<1x128xf32> to vector<8x128xf32>
    %12 = arith.addf %10, %11 : vector<8x128xf32>
    %cst_8 = arith.constant 0.000000e+00 : f32
    %13 = vector.broadcast %cst_8 : f32 to vector<8x128xf32>
    %14 = arith.maximumf %12, %13 : vector<8x128xf32>
    %15 = vector.broadcast %1 : vector<8x1xf32> to vector<8x128xf32>
    %16 = arith.mulf %15, %14 : vector<8x128xf32>
    %cst_9 = arith.constant 1.000000e+00 : f32
    %17 = vector.broadcast %cst_9 : f32 to vector<8x128xf32>
    %18 = arith.addf %17, %16 : vector<8x128xf32>
    %19 = tpu.reciprocal %18 {approx = true} : vector<8x128xf32> -> vector<8x128xf32>
    %20 = arith.divf %19, %19 : vector<8x128xf32>
    %c0_10 = arith.constant 0 : index
    %c0_11 = arith.constant 0 : index
    %21 = vector.load %arg5[%c0_10, %c0_11] : memref<8x128xf32, #tpu.memory_space<vmem>>, vector<8x128xf32>
    tpu.vector_store %arg5[%c0_10, %c0_11], %20 {strides = array<i32>} : memref<8x128xf32, #tpu.memory_space<vmem>>, vector<8x128xf32>,
    return
  }
  func.func @transform_0(%arg0: i32) -> (i32, i32) {
    %c0_i32 = arith.constant 0 : i32
    %c0_i32_0 = arith.constant 0 : i32
    return %arg0, %c0_i32 : i32, i32
  }
  func.func @transform_1(%arg0: i32) -> (i32, i32) {
    %c0_i32 = arith.constant 0 : i32
    %c0_i32_0 = arith.constant 0 : i32
    return %arg0, %c0_i32 : i32, i32
  }
  func.func @transform_2(%arg0: i32) -> (i32, i32) {
    %c0_i32 = arith.constant 0 : i32
    %c0_i32_0 = arith.constant 0 : i32
    %c0_i32_1 = arith.constant 0 : i32
    return %c0_i32, %c0_i32_0 : i32, i32
  }
  func.func @transform_3(%arg0: i32) -> (i32, i32) {
    %c0_i32 = arith.constant 0 : i32
    %c0_i32_0 = arith.constant 0 : i32
    %c0_i32_1 = arith.constant 0 : i32
    return %c0_i32, %c0_i32_0 : i32, i32
  }
  func.func @transform_4(%arg0: i32) -> (i32, i32) {
    %c0_i32 = arith.constant 0 : i32
    %c0_i32_0 = arith.constant 0 : i32
    return %arg0, %c0_i32 : i32, i32
  }
}

</mosaic_0001>

<llo_original>
// kernel: tpu_custom_call.1
$region0: #{tpu_custom_call.1}
  #allocation0 [shape = 'u32[]', space=smem, size = 0x4, offset = 0x4, fixed_abs, tag = 'smem constant byte address 0x4 - core index']
  #allocation1 [shape = 'u32[144,128]{1,0:T(1,128)}', space=vmem, size = 0x12000, scoped, tag = 'internal scratch']
  %s0 = inlined_call_operand.vmem [shape: f32[8,1], index: 0, kind: input, shape index: {}]
  %s1 = inlined_call_operand.hbm [shape: f32[8,32], index: 1, kind: input, shape index: {}]
  %s2 = inlined_call_operand.vmem [shape: bf16[32,128], index: 2, kind: input, shape index: {}]
  %s3 = inlined_call_operand.vmem [shape: f32[1,128], index: 3, kind: input, shape index: {}]
  %s4 = inlined_call_operand.hbm [shape: f32[8,128], index: 4, kind: output, shape index: {}]
  %s5 = sld [smem:[#allocation0]]
  $region30: #{tpu_custom_call.1} parent=0
    _
  %s7 = ssub.s32 1, %s5
  %s8 = scalar_select 0, %s7, %s5
  $region1: #{tpu_custom_call.1} parent=0
    #allocation2 [shape = 'u8[4096]{0}', space=vmem, size = 0x1000, scoped, tag = 'input window, operand 1, single buffered']
    #allocation3 [shape = 's32[1]{0}', space=sflag, size = 0x4, scoped, tag = 'scoped memory for tpu_custom_call.1']
    #allocation4 [shape = 's32[1]{0}', space=sflag, size = 0x4, scoped, tag = 'scoped memory for tpu_custom_call.1']
    #allocation5 [shape = 'u8[4096]{0}', space=vmem, size = 0x1000, scoped, tag = 'output window, operand 0, single buffered']
    %9 = vsyncpa [#allocation3], 0
    %10 = vsyncpa [#allocation4], 0
    // Predicated region
    $region2: #{tpu_custom_call.1} parent=1 // pred_check
      _
    $region3: #{tpu_custom_call.1} parent=1 // pred_check_branch
      %12 = sbr.rel (0) target = $region5
    $region4: #{tpu_custom_call.1} parent=1 // pred_region
      _
    $region5: #{tpu_custom_call.1} parent=1 // pred_fallthru
      _
    // Predicated region
    $region6: #{tpu_custom_call.1} parent=1 // pred_check
      _
    $region7: #{tpu_custom_call.1} parent=1 // pred_check_branch
      %14 = sbr.rel (0) target = $region9
    $region8: #{tpu_custom_call.1} parent=1 // pred_region
      %s16 = ssub.s32 128, 128
      %17 = vsyncadd [#allocation3], %s16
      %s19 = sshll.u32 [#allocation2], 4
      %s20 = int_to_ptr.vmem [resolvable:$true] %s19
      %22 = dma.hbm_to_vmem [thread:$0]  %s1, 128, %s20, [#allocation3]
    $region9: #{tpu_custom_call.1} parent=1 // pred_fallthru
      _
    // Predicated region
    $region10: #{tpu_custom_call.1} parent=1 // pred_check
      _
    $region11: #{tpu_custom_call.1} parent=1 // pred_check_branch
      %24 = sbr.rel (0) target = $region13
    $region12: #{tpu_custom_call.1} parent=1 // pred_region
      _
    $region13: #{tpu_custom_call.1} parent=1 // pred_fallthru
      _
    // Predicated region
    $region14: #{tpu_custom_call.1} parent=1 // pred_check
      _
    $region15: #{tpu_custom_call.1} parent=1 // pred_check_branch
      %26 = sbr.rel (0) target = $region17
    $region16: #{tpu_custom_call.1} parent=1 // pred_region
      _
    $region17: #{tpu_custom_call.1} parent=1 // pred_fallthru
      _
    // Predicated region
    $region18: #{tpu_custom_call.1} parent=1 // pred_check
      _
    $region19: #{tpu_custom_call.1} parent=1 // pred_check_branch
      %28 = sbr.rel (0) target = $region21
    $region20: #{tpu_custom_call.1} parent=1 // pred_region
      %29 = dma.done [#allocation3], 128
    $region21: #{tpu_custom_call.1} parent=1 // pred_fallthru
      _
    %v31 = vld [vmem:[#allocation2] sm:$0xff]
    %v32 = vld [vmem:[%s0] sm:$0xff]
    %v33 = vld [vmem:[%s2] sm:$0xf]
    %v34 = vld [vmem:[%s2 + $0x4] sm:$0xf]
    %v35 = vld [vmem:[%s2 + $0x8] sm:$0xf]
    %v36 = vld [vmem:[%s2 + $0xc] sm:$0xf]
    %v37 = vld [vmem:[%s3] sm:$0x1]
    %v38 = vmul.f32 %v31, %v31
    %vm39 = vcmask 261120
    %v40 = vsel %vm39, %v38, 0.0
    %41 = vadd.xlane.f32.xlu0 %v40
    %v42 = vpop.xlane.xlu0 %41
    %v43 = vpack.c.bf16 %v31, %v31
    %v48 = vunpack.c.l.b16 %v33
    %v49 = vunpack.c.l.b16 %v34
    %v50 = vunpack.c.l.b16 %v35
    %v51 = vunpack.c.l.b16 %v36
    %v52 = vpack.c.b16 %v49, %v48
    %v53 = vpack.c.b16 %v51, %v50
    %v57 = vsel %vm39, %v43, 0
    %59 = vmatprep.subr.bf16.mxu0 0
    %60 = vmatpush1.bf16.msra.mxu0 %v52
    %61 = vmatprep.subr.bf16.mxu0 0
    %62 = vmatpush1.bf16.msra.mxu0 %v53
    %63 = vmatprep.subr.bf16.mxu0 0
    %64 = vmatpush1.bf16.msra.mxu0 0
    %65 = vmatprep.subr.bf16.mxu0 0
    %66 = vmatpush1.bf16.msra.mxu0 0
    %67 = vmatprep.subr.bf16.mxu0 0
    %68 = vmatpush1.bf16.msra.mxu0 0
    %69 = vmatprep.subr.bf16.mxu0 0
    %70 = vmatpush1.bf16.msra.mxu0 0
    %71 = vmatprep.subr.bf16.mxu0 0
    %72 = vmatpush1.bf16.msra.mxu0 0
    %73 = vmatprep.subr.bf16.mxu0 0
    %74 = vmatpush1.bf16.msra.mxu0 0
    %75 = vmatprep.subr.bf16.mxu0 0
    %76 = vmatpush1.bf16.msra.mxu0 0
    %77 = vmatprep.subr.bf16.mxu0 0
    %78 = vmatpush1.bf16.msra.mxu0 0
    %79 = vmatprep.subr.bf16.mxu0 0
    %80 = vmatpush1.bf16.msra.mxu0 0
    %81 = vmatprep.subr.bf16.mxu0 0
    %82 = vmatpush1.bf16.msra.mxu0 0
    %83 = vmatprep.subr.bf16.mxu0 0
    %84 = vmatpush1.bf16.msra.mxu0 0
    %85 = vmatprep.subr.bf16.mxu0 0
    %86 = vmatpush1.bf16.msra.mxu0 0
    %87 = vmatprep.subr.bf16.mxu0 0
    %88 = vmatpush1.bf16.msra.mxu0 0
    %89 = vmatprep.subr.bf16.mxu0 0
    %90 = vmatpush1.bf16.msra.mxu0 0
    %91 = vmatprep.mubr.bf16.mxu0 0
    %92 = vmatmul.mubr.bf16.gmra.mrb[0].mxu0 %v57
    %v93 = vpop.f32.mrb[0].mxu0
    %v94 = vadd.f32 0.0, %v93
    %v95 = vpop.f32.mrb[0].mxu0
    %v96 = vpop.f32.mrb[0].mxu0
    %v97 = vpop.f32.mrb[0].mxu0
    %98 = vdwg.mxu0
    %v99 = vadd.f32 %v42, %v94
    %v101 = vlaneseq
    %v102 = vshrl.u32 %v101, 7
    %v103 = vsub.s32 0, %v102
    %v104 = vrot.slane %v37, %v103
    %v106 = vadd.f32 %v99, %v104
    %v107 = vmax.f32 %v106, 0.0
    %109 = vset.pattern.permute.xlu0 0
    %110 = vperm.xlu0 %109, %v32
    %v111 = vpop.permute.xlu0 %110
    %v113 = vmul.f32 %v111, %v107
    %v114 = vadd.f32 %v113, 1.0
    %v115 = vrcp.pop %v114
    %v116 = vrcp.pop %v115
    %v117 = vmul.f32 %v115, %v116
    %118 = vst [vmem:[#allocation5] sm:$0xff] %v117
    // Predicated region
    $region22: #{tpu_custom_call.1} parent=1 // pred_check
      _
    $region23: #{tpu_custom_call.1} parent=1 // pred_check_branch
      %120 = sbr.rel (0) target = $region25
    $region24: #{tpu_custom_call.1} parent=1 // pred_region
      %s122 = ssub.s32 128, 128
      %123 = vsyncadd [#allocation4], %s122
      %s125 = sshll.u32 [#allocation5], 4
      %s126 = int_to_ptr.vmem [resolvable:$true] %s125
      %128 = dma.vmem_to_hbm [thread:$0]  %s126, 128, %s4, [#allocation4]
    $region25: #{tpu_custom_call.1} parent=1 // pred_fallthru
      _
    // Predicated region
    $region26: #{tpu_custom_call.1} parent=1 // pred_check
      _
    $region27: #{tpu_custom_call.1} parent=1 // pred_check_branch
      %130 = sbr.rel (0) target = $region29
    $region28: #{tpu_custom_call.1} parent=1 // pred_region
      %131 = dma.done [#allocation4], 128
    $region29: #{tpu_custom_call.1} parent=1 // pred_fallthru
      _
    %132 = vsyncpa [#allocation3], 1
    %133 = vsyncpa [#allocation4], 1

// kernel: tpu_custom_call.1
$region0: #{tpu_custom_call.1}
  #allocation0 [shape = 'u32[]', space=smem, size = 0x4, offset = 0x4, fixed_abs, tag = 'smem constant byte address 0x4 - core index']
  #allocation1 [shape = 'u32[144,128]{1,0:T(1,128)}', space=vmem, size = 0x12000, scoped, tag = 'internal scratch']
  %s0 = inlined_call_operand.vmem [shape: f32[8,1], index: 0, kind: input, shape index: {}]
  %s1 = inlined_call_operand.hbm [shape: f32[8,32], index: 1, kind: input, shape index: {}]
  %s2 = inlined_call_operand.vmem [shape: bf16[32,128], index: 2, kind: input, shape index: {}]
  %s3 = inlined_call_operand.vmem [shape: f32[1,128], index: 3, kind: input, shape index: {}]
  %s4 = inlined_call_operand.hbm [shape: f32[8,128], index: 4, kind: output, shape index: {}]
  %s5 = sld [smem:[#allocation0]]
  $region30: #{tpu_custom_call.1} parent=0
    _
  %s7 = ssub.s32 1, %s5
  %s8 = scalar_select 0, %s7, %s5
  $region1: #{tpu_custom_call.1} parent=0
    #allocation2 [shape = 'u8[4096]{0}', space=vmem, size = 0x1000, scoped, tag = 'input window, operand 1, single buffered']
    #allocation3 [shape = 's32[1]{0}', space=sflag, size = 0x4, scoped, tag = 'scoped memory for tpu_custom_call.1']
    #allocation4 [shape = 's32[1]{0}', space=sflag, size = 0x4, scoped, tag = 'scoped memory for tpu_custom_call.1']
    #allocation5 [shape = 'u8[4096]{0}', space=vmem, size = 0x1000, scoped, tag = 'output window, operand 0, single buffered']
    %9 = vsyncpa [#allocation3], 0
    %10 = vsyncpa [#allocation4], 0
    // Predicated region
    $region2: #{tpu_custom_call.1} parent=1 // pred_check
      _
    $region3: #{tpu_custom_call.1} parent=1 // pred_check_branch
      %12 = sbr.rel (0) target = $region5
    $region4: #{tpu_custom_call.1} parent=1 // pred_region
      _
    $region5: #{tpu_custom_call.1} parent=1 // pred_fallthru
      _
    // Predicated region
    $region6: #{tpu_custom_call.1} parent=1 // pred_check
      _
    $region7: #{tpu_custom_call.1} parent=1 // pred_check_branch
      %14 = sbr.rel (0) target = $region9
    $region8: #{tpu_custom_call.1} parent=1 // pred_region
      %s16 = ssub.s32 128, 128
      %17 = vsyncadd [#allocation3], %s16
      %s19 = sshll.u32 [#allocation2], 4
      %s20 = int_to_ptr.vmem [resolvable:$true] %s19
      %22 = dma.hbm_to_vmem [thread:$0]  %s1, 128, %s20, [#allocation3]
    $region9: #{tpu_custom_call.1} parent=1 // pred_fallthru
      _
    // Predicated region
    $region10: #{tpu_custom_call.1} parent=1 // pred_check
      _
    $region11: #{tpu_custom_call.1} parent=1 // pred_check_branch
      %24 = sbr.rel (0) target = $region13
    $region12: #{tpu_custom_call.1} parent=1 // pred_region
      _
    $region13: #{tpu_custom_call.1} parent=1 // pred_fallthru
      _
    // Predicated region
    $region14: #{tpu_custom_call.1} parent=1 // pred_check
      _
    $region15: #{tpu_custom_call.1} parent=1 // pred_check_branch
      %26 = sbr.rel (0) target = $region17
    $region16: #{tpu_custom_call.1} parent=1 // pred_region
      _
    $region17: #{tpu_custom_call.1} parent=1 // pred_fallthru
      _
    // Predicated region
    $region18: #{tpu_custom_call.1} parent=1 // pred_check
      _
    $region19: #{tpu_custom_call.1} parent=1 // pred_check_branch
      %28 = sbr.rel (0) target = $region21
    $region20: #{tpu_custom_call.1} parent=1 // pred_region
      %29 = dma.done [#allocation3], 128
    $region21: #{tpu_custom_call.1} parent=1 // pred_fallthru
      _
    %v31 = vld [vmem:[#allocation2] sm:$0xff]
    %v32 = vld [vmem:[%s0] sm:$0xff]
    %v33 = vld [vmem:[%s2] sm:$0xf]
    %v34 = vld [vmem:[%s2 + $0x4] sm:$0xf]
    %v35 = vld [vmem:[%s2 + $0x8] sm:$0xf]
    %v36 = vld [vmem:[%s2 + $0xc] sm:$0xf]
    %v37 = vld [vmem:[%s3] sm:$0x1]
    %v38 = vmul.f32 %v31, %v31
    %vm39 = vcmask 261120
    %v40 = vsel %vm39, %v38, 0.0
    %41 = vadd.xlane.f32.xlu0 %v40
    %v42 = vpop.xlane.xlu0 %41
    %v43 = vpack.c.bf16 %v31, %v31
    %v48 = vunpack.c.l.b16 %v33
    %v49 = vunpack.c.l.b16 %v34
    %v50 = vunpack.c.l.b16 %v35
    %v51 = vunpack.c.l.b16 %v36
    %v52 = vpack.c.b16 %v49, %v48
    %v53 = vpack.c.b16 %v51, %v50
    %v57 = vsel %vm39, %v43, 0
    %59 = vmatprep.subr.bf16.mxu0 0
    %60 = vmatpush1.bf16.msra.mxu0 %v52
    %61 = vmatprep.subr.bf16.mxu0 0
    %62 = vmatpush1.bf16.msra.mxu0 %v53
    %63 = vmatprep.subr.bf16.mxu0 0
    %64 = vmatpush1.bf16.msra.mxu0 0
    %65 = vmatprep.subr.bf16.mxu0 0
    %66 = vmatpush1.bf16.msra.mxu0 0
    %67 = vmatprep.subr.bf16.mxu0 0
    %68 = vmatpush1.bf16.msra.mxu0 0
    %69 = vmatprep.subr.bf16.mxu0 0
    %70 = vmatpush1.bf16.msra.mxu0 0
    %71 = vmatprep.subr.bf16.mxu0 0
    %72 = vmatpush1.bf16.msra.mxu0 0
    %73 = vmatprep.subr.bf16.mxu0 0
    %74 = vmatpush1.bf16.msra.mxu0 0
    %75 = vmatprep.subr.bf16.mxu0 0
    %76 = vmatpush1.bf16.msra.mxu0 0
    %77 = vmatprep.subr.bf16.mxu0 0
    %78 = vmatpush1.bf16.msra.mxu0 0
    %79 = vmatprep.subr.bf16.mxu0 0
    %80 = vmatpush1.bf16.msra.mxu0 0
    %81 = vmatprep.subr.bf16.mxu0 0
    %82 = vmatpush1.bf16.msra.mxu0 0
    %83 = vmatprep.subr.bf16.mxu0 0
    %84 = vmatpush1.bf16.msra.mxu0 0
    %85 = vmatprep.subr.bf16.mxu0 0
    %86 = vmatpush1.bf16.msra.mxu0 0
    %87 = vmatprep.subr.bf16.mxu0 0
    %88 = vmatpush1.bf16.msra.mxu0 0
    %89 = vmatprep.subr.bf16.mxu0 0
    %90 = vmatpush1.bf16.msra.mxu0 0
    %91 = vmatprep.mubr.bf16.mxu0 0
    %92 = vmatmul.mubr.bf16.gmra.mrb[0].mxu0 %v57
    %v93 = vpop.f32.mrb[0].mxu0
    %v94 = vadd.f32 0.0, %v93
    %v95 = vpop.f32.mrb[0].mxu0
    %v96 = vpop.f32.mrb[0].mxu0
    %v97 = vpop.f32.mrb[0].mxu0
    %98 = vdwg.mxu0
    %v99 = vadd.f32 %v42, %v94
    %v101 = vlaneseq
    %v102 = vshrl.u32 %v101, 7
    %v103 = vsub.s32 0, %v102
    %v104 = vrot.slane %v37, %v103
    %v106 = vadd.f32 %v99, %v104
    %v107 = vmax.f32 %v106, 0.0
    %109 = vset.pattern.permute.xlu0 0
    %110 = vperm.xlu0 %109, %v32
    %v111 = vpop.permute.xlu0 %110
    %v113 = vmul.f32 %v111, %v107
    %v114 = vadd.f32 %v113, 1.0
    %v115 = vrcp.pop %v114
    %v116 = vrcp.pop %v115
    %v117 = vmul.f32 %v115, %v116
    %118 = vst [vmem:[#allocation5] sm:$0xff] %v117
    // Predicated region
    $region22: #{tpu_custom_call.1} parent=1 // pred_check
      _
    $region23: #{tpu_custom_call.1} parent=1 // pred_check_branch
      %120 = sbr.rel (0) target = $region25
    $region24: #{tpu_custom_call.1} parent=1 // pred_region
      %s122 = ssub.s32 128, 128
      %123 = vsyncadd [#allocation4], %s122
      %s125 = sshll.u32 [#allocation5], 4
      %s126 = int_to_ptr.vmem [resolvable:$true] %s125
      %128 = dma.vmem_to_hbm [thread:$0]  %s126, 128, %s4, [#allocation4]
    $region25: #{tpu_custom_call.1} parent=1 // pred_fallthru
      _
    // Predicated region
    $region26: #{tpu_custom_call.1} parent=1 // pred_check
      _
    $region27: #{tpu_custom_call.1} parent=1 // pred_check_branch
      %130 = sbr.rel (0) target = $region29
    $region28: #{tpu_custom_call.1} parent=1 // pred_region
      %131 = dma.done [#allocation4], 128
    $region29: #{tpu_custom_call.1} parent=1 // pred_fallthru
      _
    %132 = vsyncpa [#allocation3], 1
    %133 = vsyncpa [#allocation4], 1

</llo_original>
